<compile_context>
chip_gen: v7x
topology: tpu7x:2x2x1
jax: 0.10.0
libtpu: 0.0.40
codegen_flags: <defaults>
</compile_context>

<pallas_src>
import functools

import jax
import jax.numpy as jnp
from jax.experimental import pallas as pl
from jax.experimental.pallas import tpu as pltpu


def _ls_ce_kernel(pred_ref, tgt_ref, loss_ref, *, classes, smoothing,
                  n_rows, block_rows):
    """(block_rows, C) logits + (block_rows, 1) targets ->
    (block_rows, 1) per-row losses (rows past n_rows masked to zero)."""
    i = pl.program_id(0)

    confidence = 1.0 - smoothing
    smooth_val = smoothing / (classes - 1) if classes > 1 else 0.0

    logits = pred_ref[...].astype(jnp.float32)                   # (TB, C)

    # log_softmax pieces along the class (lane) axis; the row sum comes
    # straight from `logits` so `logits - m` is consumed only by exp.
    m = jnp.max(logits, axis=-1, keepdims=True)                  # (TB, 1)
    sum_logits = jnp.sum(logits, axis=-1, keepdims=True)         # (TB, 1)
    # NOTE: exp/log stay f32; a bf16 exp on v6e/v7x is a possible follow-up
    # for bf16 inputs if the kernel becomes EUP-bound (never on v5e).
    lse = jnp.log(jnp.sum(jnp.exp(logits - m), axis=-1, keepdims=True))

    # Gather the logit at the target class: (1, C) lane iota broadcast
    # against (TB, 1) targets + masked lane reduction.
    tgt = tgt_ref[...]                                           # (TB, 1) int32
    cls_idx = jax.lax.broadcasted_iota(jnp.int32, (1, classes), 1)
    logit_at_tgt = jnp.sum(jnp.where(cls_idx == tgt, logits, 0.0),
                           axis=-1, keepdims=True)               # (TB, 1)

    logp_at_tgt = logit_at_tgt - m - lse                         # (TB, 1)
    sum_logp = sum_logits - jnp.float32(classes) * (m + lse)     # (TB, 1)

    row_loss = -((confidence - smooth_val) * logp_at_tgt
                 + smooth_val * sum_logp)                        # (TB, 1)

    if n_rows % block_rows == 0:
        # No padding rows anywhere: plain store on every block.
        loss_ref[...] = row_loss
    else:
        last = pl.num_programs(0) - 1

        @pl.when(i != last)
        def _():
            loss_ref[...] = row_loss

        @pl.when(i == last)
        def _():
            # Zero rows past the true batch size.  OOB garbage may be NaN/Inf,
            # so this must stay a select, never a multiply-by-mask.
            row_in_blk = jax.lax.broadcasted_iota(jnp.int32, row_loss.shape, 0)
            valid = row_in_blk < (n_rows - i * block_rows)
            loss_ref[...] = jnp.where(valid, row_loss, 0.0)


def _vmem_capacity_bytes():
    try:
        return int(pltpu.get_tpu_info().vmem_capacity_bytes)
    except Exception:  # conservative fallback if the query is unavailable
        return 128 * 1024 * 1024


def _vmem_params():
    """(vmem_limit_bytes, working-set budget) tuned per TPU generation."""
    cap = _vmem_capacity_bytes()
    if cap <= 64 * 1024 * 1024:            # v7x: 64 MiB physical per TC
        return 44 * 1024 * 1024, 18 * 1024 * 1024
    # v5e / v6e: 128 MiB physical (explicit raise above the scoped default).
    return 80 * 1024 * 1024, 40 * 1024 * 1024


def _pick_block_rows(n_rows, classes, in_itemsize, budget_bytes):
    """Largest sublane-aligned row tile whose double-buffered inputs plus
    ~4 live (TB, C) f32 temps fit the generation-aware VMEM budget, clamped
    so there are always >= 2 grid blocks (v7x megacore) when N > 8."""
    per_row = (classes * (2 * in_itemsize + 4 * 4)   # 2x in bufs + ~4 f32 temps
               + 2 * 4                               # 2x int32 target bufs
               + 2 * 4 + 12 * 4)                     # 2x f32 out bufs + (TB,1) temps
    rows = budget_bytes // max(per_row, 1)
    rows = min(rows, 1024)                           # gains saturate ~512-1024
    if n_rows > 8:                                   # >= 2 blocks for 2 TCs
        rows = min(rows, ((pl.cdiv(n_rows, 2) + 7) // 8) * 8)
    rows = min(rows, ((n_rows + 7) // 8) * 8)        # don't over-pad tiny N
    rows = max(8, (rows // 8) * 8)                   # sublane-aligned
    return int(rows)


def label_smoothing_cross_entropy(pred, target, *, classes, smoothing=0.0,
                                  block_rows=None, vmem_limit_bytes=None):
    """pred: (N, C) float (f32 or bf16), target: (N,) int. Returns scalar f32."""
    N, C = pred.shape
    assert C == classes
    # NOTE: for C < 128 the lane axis is only C/128 utilized; acceptable at
    # small sizes (kernel is tiny), revisit layout if small-C dominates.

    default_limit, budget = _vmem_params()
    if vmem_limit_bytes is None:
        vmem_limit_bytes = default_limit
    if block_rows is None:
        block_rows = _pick_block_rows(N, C, jnp.dtype(pred.dtype).itemsize,
                                      budget)

    num_blocks = pl.cdiv(N, block_rows)
    tgt2d = target.astype(jnp.int32).reshape(N, 1)

    kernel = functools.partial(_ls_ce_kernel, classes=classes,
                               smoothing=float(smoothing),
                               n_rows=N, block_rows=block_rows)

    row_losses = pl.pallas_call(
        kernel,
        out_shape=jax.ShapeDtypeStruct((N, 1), jnp.float32),
        grid_spec=pltpu.PrefetchScalarGridSpec(
            num_scalar_prefetch=0,
            grid=(num_blocks,),
            in_specs=[
                pl.BlockSpec((block_rows, C), lambda i: (i, 0)),
                pl.BlockSpec((block_rows, 1), lambda i: (i, 0)),
            ],
            out_specs=pl.BlockSpec((block_rows, 1), lambda i: (i, 0)),
        ),
        compiler_params=pltpu.CompilerParams(
            dimension_semantics=("parallel",),
            vmem_limit_bytes=vmem_limit_bytes),
    )(pred, tgt2d)

    return jnp.sum(row_losses) / jnp.float32(N)


def _reference(pred, target, classes, smoothing):
    """Pure-JAX reference matching the PyTorch module."""
    logp = jax.nn.log_softmax(pred.astype(jnp.float32), axis=-1)
    confidence = 1.0 - smoothing
    smooth_val = smoothing / (classes - 1)
    onehot = jax.nn.one_hot(target, classes, dtype=jnp.float32)
    true_dist = onehot * confidence + (1.0 - onehot) * smooth_val
    return jnp.mean(jnp.sum(-true_dist * logp, axis=-1))


if __name__ == "__main__":
    smoothing = 0.1
    key = jax.random.PRNGKey(0)
    k_pred, k_tgt = jax.random.split(key)

    # Even batch (no ragged block): N=16, C=32.
    N, C = 16, 32
    pred = jax.random.normal(k_pred, (N, C), dtype=jnp.float32)
    target = jax.random.randint(k_tgt, (N,), 0, C, dtype=jnp.int32)
    loss = jax.block_until_ready(
        label_smoothing_cross_entropy(pred, target, classes=C,
                                      smoothing=smoothing))
    ref = _reference(pred, target, C, smoothing)
    assert jnp.allclose(loss, ref, rtol=1e-5, atol=1e-5), (loss, ref)

    # Ragged batch (exercises the in-kernel last-block mask): N=13.
    N2 = 13
    pred2 = jax.random.normal(k_pred, (N2, C), dtype=jnp.float32)
    target2 = jax.random.randint(k_tgt, (N2,), 0, C, dtype=jnp.int32)
    loss2 = jax.block_until_ready(
        label_smoothing_cross_entropy(pred2, target2, classes=C,
                                      smoothing=smoothing))
    ref2 = _reference(pred2, target2, C, smoothing)
    assert jnp.allclose(loss2, ref2, rtol=1e-5, atol=1e-5), (loss2, ref2)

    print("KERNEL_OK")
</pallas_src>

<mosaic_0001>
module attributes {stable_mosaic.version = 11 : i64} {
  func.func @_ls_ce_kernel(%arg0: i32, %arg1: memref<8x32xf32, #tpu.memory_space<vmem>>, %arg2: memref<8x1xi32, #tpu.memory_space<vmem>>, %arg3: memref<8x1xf32, #tpu.memory_space<vmem>>) attributes {dimension_semantics = [#tpu.dimension_semantics<parallel>], iteration_bounds = array<i64: 2>, scalar_prefetch = 0 : i64, scratch_operands = 0 : i64, tpu.core_type = #tpu.core_type<tc>, window_params = [{transform_indices = @transform_0, window_bounds = array<i64: 8, 32>}, {transform_indices = @transform_1, window_bounds = array<i64: 8, 1>}, {transform_indices = @transform_2, window_bounds = array<i64: 8, 1>}]} {
    %c0 = arith.constant 0 : index
    %c0_0 = arith.constant 0 : index
    %0 = vector.load %arg1[%c0, %c0_0] : memref<8x32xf32, #tpu.memory_space<vmem>>, vector<8x32xf32>
    %cst = arith.constant dense<0xFF800000> : vector<8xf32>
    %1 = vector.multi_reduction <maximumf>, %0, %cst [1] : vector<8x32xf32> to vector<8xf32>
    %2 = vector.shape_cast %1 : vector<8xf32> to vector<8x1xf32>
    %cst_1 = arith.constant dense<0.000000e+00> : vector<8xf32>
    %3 = vector.multi_reduction <add>, %0, %cst_1 [1] : vector<8x32xf32> to vector<8xf32>
    %4 = vector.shape_cast %3 : vector<8xf32> to vector<8x1xf32>
    %5 = vector.broadcast %2 : vector<8x1xf32> to vector<8x32xf32>
    %6 = arith.subf %0, %5 : vector<8x32xf32>
    %7 = math.exp %6 : vector<8x32xf32>
    %cst_2 = arith.constant dense<0.000000e+00> : vector<8xf32>
    %8 = vector.multi_reduction <add>, %7, %cst_2 [1] : vector<8x32xf32> to vector<8xf32>
    %9 = vector.shape_cast %8 : vector<8xf32> to vector<8x1xf32>
    %10 = math.log %9 : vector<8x1xf32>
    %c0_3 = arith.constant 0 : index
    %c0_4 = arith.constant 0 : index
    %11 = vector.load %arg2[%c0_3, %c0_4] : memref<8x1xi32, #tpu.memory_space<vmem>>, vector<8x1xi32>
    %12 = tpu.iota {dimensions = array<i32: 1>} : vector<1x32xi32>
    %13 = vector.broadcast %12 : vector<1x32xi32> to vector<8x32xi32>
    %14 = vector.broadcast %11 : vector<8x1xi32> to vector<8x32xi32>
    %15 = arith.cmpi eq, %13, %14 : vector<8x32xi32>
    %cst_5 = arith.constant 0.000000e+00 : f32
    %16 = vector.broadcast %cst_5 : f32 to vector<8x32xf32>
    %17 = arith.select %15, %0, %16 : vector<8x32xi1>, vector<8x32xf32>
    %cst_6 = arith.constant dense<0.000000e+00> : vector<8xf32>
    %18 = vector.multi_reduction <add>, %17, %cst_6 [1] : vector<8x32xf32> to vector<8xf32>
    %19 = vector.shape_cast %18 : vector<8xf32> to vector<8x1xf32>
    %20 = arith.subf %19, %2 : vector<8x1xf32>
    %21 = arith.subf %20, %10 : vector<8x1xf32>
    %22 = arith.addf %2, %10 : vector<8x1xf32>
    %cst_7 = arith.constant 3.200000e+01 : f32
    %23 = vector.broadcast %cst_7 : f32 to vector<8x1xf32>
    %24 = arith.mulf %23, %22 : vector<8x1xf32>
    %25 = arith.subf %4, %24 : vector<8x1xf32>
    %cst_8 = arith.constant 0.896774172 : f32
    %26 = vector.broadcast %cst_8 : f32 to vector<8x1xf32>
    %27 = arith.mulf %26, %21 : vector<8x1xf32>
    %cst_9 = arith.constant 0.0032258064 : f32
    %28 = vector.broadcast %cst_9 : f32 to vector<8x1xf32>
    %29 = arith.mulf %28, %25 : vector<8x1xf32>
    %30 = arith.addf %27, %29 : vector<8x1xf32>
    %cst_10 = arith.constant 0.000000e+00 : f32
    %31 = vector.broadcast %cst_10 : f32 to vector<8x1xf32>
    %32 = arith.subf %31, %30 : vector<8x1xf32>
    %c0_11 = arith.constant 0 : index
    %c0_12 = arith.constant 0 : index
    %33 = vector.load %arg3[%c0_11, %c0_12] : memref<8x1xf32, #tpu.memory_space<vmem>>, vector<8x1xf32>
    tpu.vector_store %arg3[%c0_11, %c0_12], %32 {strides = array<i32>} : memref<8x1xf32, #tpu.memory_space<vmem>>, vector<8x1xf32>,
    return
  }
  func.func @transform_0(%arg0: i32) -> (i32, i32) {
    %c0_i32 = arith.constant 0 : i32
    %c0_i32_0 = arith.constant 0 : i32
    return %arg0, %c0_i32 : i32, i32
  }
  func.func @transform_1(%arg0: i32) -> (i32, i32) {
    %c0_i32 = arith.constant 0 : i32
    %c0_i32_0 = arith.constant 0 : i32
    return %arg0, %c0_i32 : i32, i32
  }
  func.func @transform_2(%arg0: i32) -> (i32, i32) {
    %c0_i32 = arith.constant 0 : i32
    %c0_i32_0 = arith.constant 0 : i32
    return %arg0, %c0_i32 : i32, i32
  }
}

</mosaic_0001>

<llo_original>
// kernel: tpu_custom_call.1
$region0: #{tpu_custom_call.1}
  #allocation0 [shape = 'u32[]', space=smem, size = 0x4, offset = 0x4, fixed_abs, tag = 'smem constant byte address 0x4 - core index']
  #allocation1 [shape = 'u32[144,128]{1,0:T(1,128)}', space=vmem, size = 0x12000, scoped, tag = 'internal scratch']
  %s0 = inlined_call_operand.hbm [shape: f32[16,32], index: 0, kind: input, shape index: {}]
  %s1 = inlined_call_operand.hbm [shape: s32[16,1], index: 1, kind: input, shape index: {}]
  %s2 = inlined_call_operand.hbm [shape: f32[16,1], index: 2, kind: output, shape index: {}]
  %s3 = sld [smem:[#allocation0]]
  $region49: #{tpu_custom_call.1} parent=0
    _
  %s5 = ssub.s32 1, %s3
  %s6 = scalar_select 0, %s5, %s3
  $region1: #{tpu_custom_call.1} parent=0
    #allocation2 [shape = 'u8[8192]{0}', space=vmem, size = 0x2000, scoped, tag = 'input window, operand 0']
    #allocation3 [shape = 's32[2]{0}', space=sflag, size = 0x8, scoped, tag = 'scoped memory for tpu_custom_call.1']
    #allocation4 [shape = 's32[2]{0}', space=sflag, size = 0x8, scoped, tag = 'scoped memory for tpu_custom_call.1']
    #allocation5 [shape = 'u8[8192]{0}', space=vmem, size = 0x2000, scoped, tag = 'input window, operand 1']
    #allocation6 [shape = 's32[2]{0}', space=sflag, size = 0x8, scoped, tag = 'scoped memory for tpu_custom_call.1']
    #allocation7 [shape = 'u8[8192]{0}', space=vmem, size = 0x2000, scoped, tag = 'output window, operand 0']
    %7 = vsyncpa [#allocation3], 0
    %s8 = scalar_lea.sflag [#allocation3], 1
    %9 = vsyncpa %s8, 0
    %10 = vsyncpa [#allocation6], 0
    %s11 = scalar_lea.sflag [#allocation6], 1
    %12 = vsyncpa %s11, 0
    %13 = vsyncpa [#allocation4], 0
    %s14 = scalar_lea.sflag [#allocation4], 1
    %15 = vsyncpa %s14, 0
    loop: start=0, step=1, limit=4
    $region2: #{tpu_custom_call.1} parent=1 // loop_pre_header
      _
    $region3: #{tpu_custom_call.1} parent=1 // loop_header
      %s17 = sphi 0, %s21
      %p18 = scmp.ge.s32.totalorder %s17, 4
      %s27 = sphi 0, %s29
      %s30 = sphi 0, %s27
      %s31 = sphi 0, %s30
      %s47 = sphi 0, %s31
      %s53 = sphi 0, %s55
      %s56 = sphi 0, %s53
      %s57 = sphi 0, %s56
      %s73 = sphi 0, %s57
      %s79 = sphi 0, %s81
      %s82 = sphi 0, %s79
      %s83 = sphi 0, %s82
      %s99 = sphi 0, %s83
    $region4: #{tpu_custom_call.1} parent=1 // loop_header_branch
      %20 = sbr.rel (%p18) target = $region8
    $region5: #{tpu_custom_call.1} parent=1 // loop_body
      %s22 = ssub.s32 %s17, 1
      %s23 = ssub.s32 %s17, 2
      %s24 = sadd.s32 %s17, 1
      %s25 = ssub.s32 %s17, %s24
      %p26 = scmp.eq.s32.totalorder %s25, 0
      %s28 = sadd.s32 %s27, 1
      %s29 = scalar_select %p26, %s27, %s28
      %p32 = pneg %p26
      %p33 = scmp.eq.s32.totalorder %s17, 1
      %p34 = por %p32, %p33
      %p35 = scmp.ne.s32.totalorder %s27, %s30
      %p36 = scmp.eq.s32.totalorder %s17, 0
      %p37 = por %p35, %p36
      %p38 = scmp.ne.s32.totalorder %s27, %s30
      %p39 = scmp.eq.s32.totalorder %s22, 1
      %p40 = por %p38, %p39
      %p41 = scmp.ne.s32.totalorder %s30, %s31
      %p42 = scmp.eq.s32.totalorder %s22, 0
      %p43 = por %p41, %p42
      %p44 = scmp.ne.s32.totalorder %s30, %s31
      %p45 = scmp.eq.s32.totalorder %s23, 1
      %p46 = por %p44, %p45
      %p48 = scmp.ne.s32.totalorder %s31, %s47
      %p49 = scmp.eq.s32.totalorder %s23, 0
      %p50 = por %p48, %p49
      %s51 = ssub.s32 %s17, %s24
      %p52 = scmp.eq.s32.totalorder %s51, 0
      %s54 = sadd.s32 %s53, 1
      %s55 = scalar_select %p52, %s53, %s54
      %p58 = pneg %p52
      %p59 = scmp.eq.s32.totalorder %s17, 1
      %p60 = por %p58, %p59
      %p61 = scmp.ne.s32.totalorder %s53, %s56
      %p62 = scmp.eq.s32.totalorder %s17, 0
      %p63 = por %p61, %p62
      %p64 = scmp.ne.s32.totalorder %s53, %s56
      %p65 = scmp.eq.s32.totalorder %s22, 1
      %p66 = por %p64, %p65
      %p67 = scmp.ne.s32.totalorder %s56, %s57
      %p68 = scmp.eq.s32.totalorder %s22, 0
      %p69 = por %p67, %p68
      %p70 = scmp.ne.s32.totalorder %s56, %s57
      %p71 = scmp.eq.s32.totalorder %s23, 1
      %p72 = por %p70, %p71
      %p74 = scmp.ne.s32.totalorder %s57, %s73
      %p75 = scmp.eq.s32.totalorder %s23, 0
      %p76 = por %p74, %p75
      %s77 = ssub.s32 %s17, %s24
      %p78 = scmp.eq.s32.totalorder %s77, 0
      %s80 = sadd.s32 %s79, 1
      %s81 = scalar_select %p78, %s79, %s80
      %p84 = pneg %p78
      %p85 = scmp.eq.s32.totalorder %s17, 1
      %p86 = por %p84, %p85
      %p87 = scmp.ne.s32.totalorder %s79, %s82
      %p88 = scmp.eq.s32.totalorder %s17, 0
      %p89 = por %p87, %p88
      %p90 = scmp.ne.s32.totalorder %s79, %s82
      %p91 = scmp.eq.s32.totalorder %s22, 1
      %p92 = por %p90, %p91
      %p93 = scmp.ne.s32.totalorder %s82, %s83
      %p94 = scmp.eq.s32.totalorder %s22, 0
      %p95 = por %p93, %p94
      %p96 = scmp.ne.s32.totalorder %s82, %s83
      %p97 = scmp.eq.s32.totalorder %s23, 1
      %p98 = por %p96, %p97
      %p100 = scmp.ne.s32.totalorder %s83, %s99
      %p101 = scmp.eq.s32.totalorder %s23, 0
      %p102 = por %p100, %p101
      %p103 = scmp.le.s32.totalorder 1, %s17
      %p104 = scmp.lt.s32.totalorder %s17, 3
      %p105 = pnand %p103, %p104
      %p106 = pneg %p105
      // Predicated region
      $region9: #{tpu_custom_call.1} parent=5 // pred_check
        _
      $region10: #{tpu_custom_call.1} parent=5 // pred_check_branch
        %108 = sbr.rel (%p105) target = $region12
      $region11: #{tpu_custom_call.1} parent=5 // pred_region
        %s109 = ssub.s32 %s17, 1
      $region12: #{tpu_custom_call.1} parent=5 // pred_fallthru
        _
      %p110 = scmp.lt.s32.totalorder %s17, 2
      // Predicated region
      $region13: #{tpu_custom_call.1} parent=5 // pred_check
        %p111 = pneg %p110
      $region14: #{tpu_custom_call.1} parent=5 // pred_check_branch
        %113 = sbr.rel (%p111) target = $region16
      $region15: #{tpu_custom_call.1} parent=5 // pred_region
        // Predicated region
        $region17: #{tpu_custom_call.1} parent=15 // pred_check
          %p114 = pneg %p37
        $region18: #{tpu_custom_call.1} parent=15 // pred_check_branch
          %116 = sbr.rel (%p114) target = $region20
        $region19: #{tpu_custom_call.1} parent=15 // pred_region
          %s117 = sand.u32 %s27, 1
          %s118 = scalar_lea.sflag [#allocation3], %s117
          %s119 = sand.u32 %s27, 1
          %s120 = smul.addr %s119, 8
          %s121 = scalar_lea.vmem [#allocation2], %s120
          %s123 = ssub.s32 128, 128
          %124 = vsyncadd %s118, %s123
          %s125 = smul.addr %s17, 128
          %s126 = scalar_lea.hbm %s0, %s125
          %s128 = sshll.u32 %s121, 4
          %s129 = int_to_ptr.vmem [resolvable:$true] %s128
          %131 = dma.hbm_to_vmem [thread:$0]  %s126, 128, %s129, %s118
        $region20: #{tpu_custom_call.1} parent=15 // pred_fallthru
          _
        // Predicated region
        $region21: #{tpu_custom_call.1} parent=15 // pred_check
          %p132 = pneg %p63
        $region22: #{tpu_custom_call.1} parent=15 // pred_check_branch
          %134 = sbr.rel (%p132) target = $region24
        $region23: #{tpu_custom_call.1} parent=15 // pred_region
          %s135 = sand.u32 %s53, 1
          %s136 = scalar_lea.sflag [#allocation6], %s135
          %s137 = sand.u32 %s53, 1
          %s138 = smul.addr %s137, 8
          %s139 = scalar_lea.vmem [#allocation5], %s138
          %s141 = ssub.s32 128, 128
          %142 = vsyncadd %s136, %s141
          %s143 = smul.addr %s17, 128
          %s144 = scalar_lea.hbm %s1, %s143
          %s146 = sshll.u32 %s139, 4
          %s147 = int_to_ptr.vmem [resolvable:$true] %s146
          %149 = dma.hbm_to_vmem [thread:$0]  %s144, 128, %s147, %s136
        $region24: #{tpu_custom_call.1} parent=15 // pred_fallthru
          _
      $region16: #{tpu_custom_call.1} parent=5 // pred_fallthru
        _
      %p150 = scmp.le.s32.totalorder 1, %s17
      %p151 = scmp.lt.s32.totalorder %s17, 3
      %p152 = pnand %p150, %p151
      %p153 = pneg %p152
      // Predicated region
      $region25: #{tpu_custom_call.1} parent=5 // pred_check
        _
      $region26: #{tpu_custom_call.1} parent=5 // pred_check_branch
        %155 = sbr.rel (%p152) target = $region28
      $region27: #{tpu_custom_call.1} parent=5 // pred_region
        %s156 = ssub.s32 %s17, 1
        %s157 = sand.u32 %s30, 1
        %s158 = scalar_lea.sflag [#allocation3], %s157
        %s159 = sand.u32 %s30, 1
        %s160 = smul.addr %s159, 8
        %s161 = scalar_lea.vmem [#allocation2], %s160
        // Predicated region
        $region29: #{tpu_custom_call.1} parent=27 // pred_check
          %p162 = pneg %p43
        $region30: #{tpu_custom_call.1} parent=27 // pred_check_branch
          %164 = sbr.rel (%p162) target = $region32
        $region31: #{tpu_custom_call.1} parent=27 // pred_region
          %165 = dma.done %s158, 128
        $region32: #{tpu_custom_call.1} parent=27 // pred_fallthru
          _
        %s166 = sand.u32 %s56, 1
        %s167 = scalar_lea.sflag [#allocation6], %s166
        %s168 = sand.u32 %s56, 1
        %s169 = smul.addr %s168, 8
        %s170 = scalar_lea.vmem [#allocation5], %s169
        // Predicated region
        $region33: #{tpu_custom_call.1} parent=27 // pred_check
          %p171 = pneg %p69
        $region34: #{tpu_custom_call.1} parent=27 // pred_check_branch
          %173 = sbr.rel (%p171) target = $region36
        $region35: #{tpu_custom_call.1} parent=27 // pred_region
          %174 = dma.done %s167, 128
        $region36: #{tpu_custom_call.1} parent=27 // pred_fallthru
          _
        %s175 = sand.u32 %s30, 1
        %s176 = scalar_lea.sflag [#allocation3], %s175
        %s177 = sand.u32 %s30, 1
        %s178 = smul.addr %s177, 8
        %s179 = scalar_lea.vmem [#allocation2], %s178
        %p180 = pneg %p43
        %p181 = pneg %p40
        %s182 = sand.u32 %s56, 1
        %s183 = scalar_lea.sflag [#allocation6], %s182
        %s184 = sand.u32 %s56, 1
        %s185 = smul.addr %s184, 8
        %s186 = scalar_lea.vmem [#allocation5], %s185
        %p187 = pneg %p69
        %p188 = pneg %p66
        %p189 = pneg %p95
        %p190 = pneg %p92
        %s191 = sand.u32 %s82, 1
        %s192 = scalar_lea.sflag [#allocation4], %s191
        %s193 = sand.u32 %s82, 1
        %s194 = smul.addr %s193, 8
        %s195 = scalar_lea.vmem [#allocation7], %s194
        %v196 = vld [vmem:[%s161] sm:$0xff]
        %vm197 = vcmask 261120
        %v198 = vsel %vm197, %v196, -inf
        %199 = vmax.xlane.f32.xlu0 %v198
        %v200 = vpop.xlane.xlu0 %199
        %v201 = vsel %vm197, %v196, 0.0
        %202 = vadd.xlane.f32.xlu0 %v201
        %v203 = vpop.xlane.xlu0 %202
        %v204 = vsub.f32 %v196, %v200
        %v205 = vmul.f32 %v204, 1.442695
        %v206 = vpow.pop %v205
        %v207 = vsel %vm197, %v206, 0.0
        %208 = vadd.xlane.f32.xlu0 %v207
        %v209 = vpop.xlane.xlu0 %208
        %v210 = vlog2.pop %v209
        %v211 = vmul.f32 %v210, 0.6931472
        %v212 = vld [vmem:[%s170] sm:$0xff]
        %v213 = vlaneseq
        %v214 = vand.u32 %v213, 127
        %215 = vset.pattern.permute.xlu0 0
        %216 = vperm.xlu0 %215, %v212
        %v217 = vpop.permute.xlu0 %216
        %vm218 = vcmp.eq.s32.totalorder %v214, %v217
        %v219 = vsel %vm218, %v196, 0.0
        %v220 = vsel %vm197, %v219, 0.0
        %221 = vadd.xlane.f32.xlu0 %v220
        %v222 = vpop.xlane.xlu0 %221
        %v223 = vsub.f32 %v222, %v200
        %v224 = vsub.f32 %v223, %v211
        %v225 = vadd.f32 %v200, %v211
        %v226 = vmul.f32 %v225, 32.0
        %v227 = vsub.f32 %v203, %v226
        %v228 = vmul.f32 %v224, 0.8967742
        %v229 = vmul.f32 %v227, 0.0032258064
        %v230 = vadd.f32 %v228, %v229
        %v231 = vsub.f32 0.0, %v230
        %vm232 = vcmask 7168
        %233 = vst.msk [vmem:[%s195] sm:$0xff] %vm232, %v231
        %s234 = sand.u32 %s82, 1
        %s235 = scalar_lea.sflag [#allocation4], %s234
        %s236 = sand.u32 %s82, 1
        %s237 = smul.addr %s236, 8
        %s238 = scalar_lea.vmem [#allocation7], %s237
        // Predicated region
        $region37: #{tpu_custom_call.1} parent=27 // pred_check
          %p239 = pneg %p92
        $region38: #{tpu_custom_call.1} parent=27 // pred_check_branch
          %241 = sbr.rel (%p239) target = $region40
        $region39: #{tpu_custom_call.1} parent=27 // pred_region
          %s243 = ssub.s32 128, 128
          %244 = vsyncadd %s235, %s243
          %s245 = smul.addr %s22, 128
          %s246 = scalar_lea.hbm %s2, %s245
          %s248 = sshll.u32 %s238, 4
          %s249 = int_to_ptr.vmem [resolvable:$true] %s248
          %251 = dma.vmem_to_hbm [thread:$0]  %s249, 128, %s246, %s235
        $region40: #{tpu_custom_call.1} parent=27 // pred_fallthru
          _
      $region28: #{tpu_custom_call.1} parent=5 // pred_fallthru
        _
      %p252 = scmp.le.s32.totalorder 2, %s17
      // Predicated region
      $region41: #{tpu_custom_call.1} parent=5 // pred_check
        %p253 = pneg %p252
      $region42: #{tpu_custom_call.1} parent=5 // pred_check_branch
        %255 = sbr.rel (%p253) target = $region44
      $region43: #{tpu_custom_call.1} parent=5 // pred_region
        %s256 = ssub.s32 %s17, 2
        // Predicated region
        $region45: #{tpu_custom_call.1} parent=43 // pred_check
          %p257 = pneg %p98
        $region46: #{tpu_custom_call.1} parent=43 // pred_check_branch
          %259 = sbr.rel (%p257) target = $region48
        $region47: #{tpu_custom_call.1} parent=43 // pred_region
          %s260 = sand.u32 %s83, 1
          %s261 = scalar_lea.sflag [#allocation4], %s260
          %s262 = sand.u32 %s83, 1
          %s263 = smul.addr %s262, 8
          %s264 = scalar_lea.vmem [#allocation7], %s263
          %265 = dma.done %s261, 128
        $region48: #{tpu_custom_call.1} parent=43 // pred_fallthru
          _
      $region44: #{tpu_custom_call.1} parent=5 // pred_fallthru
        _
    $region6: #{tpu_custom_call.1} parent=1 // loop_footer
      %s21 = sadd.s32 1, %s17
    $region7: #{tpu_custom_call.1} parent=1 // loop_footer_branch
      %16 = sbr.rel target = $region3
    $region8: #{tpu_custom_call.1} parent=1 // loop_exit
      _
    %266 = vsyncpa [#allocation3], 1
    %s267 = scalar_lea.sflag [#allocation3], 1
    %268 = vsyncpa %s267, 1
    %269 = vsyncpa [#allocation6], 1
    %s270 = scalar_lea.sflag [#allocation6], 1
    %271 = vsyncpa %s270, 1
    %272 = vsyncpa [#allocation4], 1
    %s273 = scalar_lea.sflag [#allocation4], 1
    %274 = vsyncpa %s273, 1

</llo_original>
